<compile_context>
chip_gen: v6e
topology: v6e:2x2x1
jax: 0.10.0
libtpu: 0.0.40
codegen_flags: <defaults>
</compile_context>

<pallas_src>
import functools

import jax
import jax.numpy as jnp
from jax.experimental import pallas as pl
from jax.experimental.pallas import tpu as pltpu


def _round_up(a, b):
    return (a + b - 1) // b * b


def _cdiv(a, b):
    return -(-a // b)


def _sublane(dtype):
    # sublane packing multiple: f32 -> 8, bf16 -> 16, int8/fp8 -> 32
    return max(8, 32 // jnp.dtype(dtype).itemsize)


def _vmem_budget_bytes():
    """Generation-aware VMEM budget (leave headroom for Mosaic scratch)."""
    try:
        cap = int(pltpu.get_tpu_info().vmem_capacity_bytes)
    except Exception:
        cap = None
    if not cap or cap <= 0:
        cap = 64 * 1024 * 1024                      # conservative: v7x per-core
    if cap <= 64 * 1024 * 1024:                     # v7x: clamp well below physical
        return min(int(0.75 * cap), 52 * 1024 * 1024)
    return min(int(0.78 * cap), 100 * 1024 * 1024)  # v5e/v6e: 128 MiB physical


def _spec(block_shape, index_map, buffers=None):
    """BlockSpec with optional N-deep buffering (falls back if unsupported)."""
    if buffers is not None and hasattr(pl, "Buffered"):
        try:
            return pl.BlockSpec(block_shape, index_map,
                                pipeline_mode=pl.Buffered(buffers))
        except TypeError:
            pass
    return pl.BlockSpec(block_shape, index_map)


# ---------------------------------------------------------------------------
# Kernel 1: OTU importance weights, gridded over R ("parallel").
#   kappa (R, D, 1), dist (D, J) -> w (R, D, J) f32 [, w_cd (R, D, J) compute_dtype]
# The compute-dtype operand cast is fused into the store (no extra HBM pass).
# ---------------------------------------------------------------------------
def _otu_weights_kernel(kappa_ref, dist_ref, w_ref, wcd_ref=None, *, k):
    kap2 = kappa_ref[0] ** 2                                           # (D, 1)
    z = 2.0 * k * (kap2 - dist_ref[...])                               # (D, J)
    w_un = jax.nn.sigmoid(z)                                           # EUP
    denom = jnp.maximum(jnp.sum(w_un, axis=-1, keepdims=True), 1.0)    # clamp(1)
    w = w_un / denom
    w_ref[0] = w
    if wcd_ref is not None:                                            # fused cast
        wcd_ref[0] = w.astype(wcd_ref.dtype)


def _compute_otu_weights(kappa, dist, k, compute_dtype):
    R, D = kappa.shape
    J = dist.shape[1]
    kappa3 = kappa.astype(jnp.float32).reshape(R, D, 1)   # free layout-preserving view
    dist32 = dist.astype(jnp.float32)
    emit_cast = jnp.dtype(compute_dtype) != jnp.dtype(jnp.float32)

    out_shape = [jax.ShapeDtypeStruct((R, D, J), jnp.float32)]
    out_specs = [pl.BlockSpec((1, D, J), lambda r: (r, 0, 0))]
    if emit_cast:
        out_shape.append(jax.ShapeDtypeStruct((R, D, J), compute_dtype))
        out_specs.append(pl.BlockSpec((1, D, J), lambda r: (r, 0, 0)))

    res = pl.pallas_call(
        functools.partial(_otu_weights_kernel, k=float(k)),
        out_shape=tuple(out_shape) if emit_cast else out_shape[0],
        grid_spec=pltpu.PrefetchScalarGridSpec(
            num_scalar_prefetch=0,
            grid=(R,),
            in_specs=[
                pl.BlockSpec((1, D, 1), lambda r: (r, 0, 0)),   # kappa row
                pl.BlockSpec((D, J), lambda r: (0, 0)),         # dist, resident
            ],
            out_specs=tuple(out_specs) if emit_cast else out_specs[0],
        ),
        compiler_params=pltpu.CompilerParams(
            dimension_semantics=("parallel",)),
        cost_estimate=pl.CostEstimate(
            flops=6 * R * D * J,
            transcendentals=R * D * J,
            bytes_accessed=4 * (R * D + D * J + R * D * J)
                           + (jnp.dtype(compute_dtype).itemsize * R * D * J
                              if emit_cast else 0),
        ),
    )(kappa3, dist32)

    if emit_cast:
        otu_wts, w_cd = res
        return otu_wts, w_cd
    return res, res


# ---------------------------------------------------------------------------
# Kernel 2a (native layout): out(s, M, TT) = W(M, J) @ x(s, J, TT)
# Kernel 2b (flattened fallback): out(M, TN) = W(M, J) @ X(J, TN)
# W stays resident in VMEM across the grid; f32 accumulation on the MXU.
# ---------------------------------------------------------------------------
def _agg_matmul_sjt_kernel(w_ref, x_ref, o_ref):
    o_ref[0] = jnp.dot(w_ref[...], x_ref[0],
                       preferred_element_type=jnp.float32).astype(o_ref.dtype)


def _agg_matmul_flat_kernel(w_ref, x_ref, o_ref):
    o_ref[...] = jnp.dot(w_ref[...], x_ref[...],
                         preferred_element_type=jnp.float32).astype(o_ref.dtype)


def spatial_agg(x, kappa, dist, k=1.0, compute_dtype=jnp.float32,
                out_dtype=jnp.float32):
    """x: (S, J, T), kappa: (R, D), dist: (D, J) ->
       (out (S, R, D, T) out_dtype, otu_wts (R, D, J) f32)"""
    S, J, T = x.shape
    R, D = kappa.shape
    assert dist.shape == (D, J)
    M = R * D

    # Weights (elementwise math in f32 — v5e has no bf16 VPU/EUP), with the
    # matmul operand already cast to compute_dtype inside the kernel.
    otu_wts, w_op = _compute_otu_weights(kappa, dist, k, compute_dtype)
    w2d = w_op.reshape(M, J)                       # collapse of leading dims: free

    x_cd = x.astype(compute_dtype)
    itemsize = jnp.dtype(compute_dtype).itemsize
    out_itemsize = jnp.dtype(out_dtype).itemsize

    # --- VMEM budget and lane-tile derivation (lane/sublane padding aware) ---
    budget = _vmem_budget_bytes()
    x_buffers = 3 if J <= 64 else 2                # small K -> DMA-latency exposed
    # resident W: double-buffered by default (single-buffering it would reclaim this)
    w_bytes = 2 * _round_up(M, _sublane(compute_dtype)) * _round_up(J, 128) * itemsize
    per_lane = (x_buffers * _round_up(J, _sublane(compute_dtype)) * itemsize
                + 2 * _round_up(M, _sublane(out_dtype)) * out_itemsize)

    def _lane_tile(full_lane):
        avail = budget - w_bytes
        tile = (avail // per_lane) // 128 * 128 if avail > 0 else 0
        return int(min(max(128, tile), full_lane))

    T_128 = _round_up(T, 128)
    use_native = T_128 <= 2 * T        # T >= ~64: native layout is lane-dense enough

    if use_native:
        # ---- native (S, J, T) layout: no transposes, free (S,R,D,T) reshape ----
        TT = _lane_tile(T_128)
        n_t = _cdiv(T_128, TT)
        if S * n_t < 2 and TT >= 256:  # give v7x's 2 TensorCores something to split
            TT //= 2
            n_t = _cdiv(T_128, TT)
        T_pad = n_t * TT
        if T_pad != T:
            x_cd = jnp.pad(x_cd, ((0, 0), (0, 0), (0, T_pad - T)))

        out3 = pl.pallas_call(
            _agg_matmul_sjt_kernel,
            out_shape=jax.ShapeDtypeStruct((S, M, T_pad), out_dtype),
            grid_spec=pltpu.PrefetchScalarGridSpec(
                num_scalar_prefetch=0,
                grid=(S, n_t),
                in_specs=[
                    pl.BlockSpec((M, J), lambda s, t: (0, 0)),        # resident W
                    _spec((1, J, TT), lambda s, t: (s, 0, t),
                          buffers=3 if J <= 64 else None),            # x tile
                ],
                out_specs=pl.BlockSpec((1, M, TT), lambda s, t: (s, 0, t)),
            ),
            compiler_params=pltpu.CompilerParams(
                dimension_semantics=("parallel", "parallel"),
                vmem_limit_bytes=budget,
            ),
            cost_estimate=pl.CostEstimate(
                flops=2 * S * M * T_pad * J,
                transcendentals=0,
                bytes_accessed=itemsize * (M * J + S * J * T_pad)
                               + out_itemsize * S * M * T_pad,
            ),
        )(w2d, x_cd)

        if T_pad != T:
            out3 = out3[:, :, :T]
        out = out3.reshape(S, R, D, T)             # split M -> (R, D): free
    else:
        # ---- small-T fallback: flatten N = S*T so stores stay lane-dense ----
        N = S * T
        x2d = jnp.transpose(x_cd, (1, 0, 2)).reshape(J, N)
        N_128 = _round_up(N, 128)
        TN = _lane_tile(N_128)
        n_tiles = _cdiv(N_128, TN)
        if n_tiles < 2 and TN >= 256:
            TN //= 2
            n_tiles = _cdiv(N_128, TN)
        N_pad = n_tiles * TN
        if N_pad != N:
            x2d = jnp.pad(x2d, ((0, 0), (0, N_pad - N)))

        out2d = pl.pallas_call(
            _agg_matmul_flat_kernel,
            out_shape=jax.ShapeDtypeStruct((M, N_pad), out_dtype),
            grid_spec=pltpu.PrefetchScalarGridSpec(
                num_scalar_prefetch=0,
                grid=(n_tiles,),
                in_specs=[
                    pl.BlockSpec((M, J), lambda n: (0, 0)),           # resident W
                    _spec((J, TN), lambda n: (0, n),
                          buffers=3 if J <= 64 else None),            # x tile
                ],
                out_specs=pl.BlockSpec((M, TN), lambda n: (0, n)),
            ),
            compiler_params=pltpu.CompilerParams(
                dimension_semantics=("parallel",),
                vmem_limit_bytes=budget,
            ),
            cost_estimate=pl.CostEstimate(
                flops=2 * M * N_pad * J,
                transcendentals=0,
                bytes_accessed=itemsize * (M * J + J * N_pad)
                               + out_itemsize * M * N_pad,
            ),
        )(w2d, x2d)

        if N_pad != N:
            out2d = out2d[:, :N]
        out = (out2d.reshape(M, S, T).transpose(1, 0, 2).reshape(S, R, D, T))

    return out, otu_wts


def _reference(x, kappa, dist, k=1.0):
    w_un = jax.nn.sigmoid(2.0 * k * (kappa[:, :, None] ** 2 - dist[None, :, :]))
    w = w_un / jnp.maximum(jnp.sum(w_un, axis=-1, keepdims=True), 1.0)
    out = jnp.einsum('kij,sjt->skit', w, x)
    return out, w


if __name__ == "__main__":
    key = jax.random.PRNGKey(0)
    kx, kk, kd, kx2 = jax.random.split(key, 4)

    R, D = 4, 8                  # num_rules, num_detectors
    S, J, T = 2, 16, 8           # samples, OTUs, time (small-T fallback path)

    x = jax.random.normal(kx, (S, J, T), dtype=jnp.float32)
    kappa = jax.random.normal(kk, (R, D), dtype=jnp.float32)
    dist = jnp.abs(jax.random.normal(kd, (D, J), dtype=jnp.float32))  # distances >= 0

    ref_out, ref_w = _reference(x, kappa, dist, k=1.0)

    # f32 path, flattened (small T) grid: strict correctness check.
    out, otu_wts = spatial_agg(x, kappa, dist, k=1.0)
    jax.block_until_ready((out, otu_wts))
    assert out.shape == (S, R, D, T)
    assert otu_wts.shape == (R, D, J)
    assert jnp.allclose(out, ref_out, atol=1e-5, rtol=1e-5)
    assert jnp.allclose(otu_wts, ref_w, atol=1e-6, rtol=1e-6)

    # bf16 operand path (fused cast in the weight kernel; f32 accumulation).
    out_bf, _ = spatial_agg(x, kappa, dist, k=1.0, compute_dtype=jnp.bfloat16)
    jax.block_until_ready(out_bf)
    assert jnp.allclose(out_bf, ref_out, atol=3e-2, rtol=3e-2)

    # Native (S, J, T) layout path: T not a multiple of 128 exercises padding +
    # final slice; no wrapper transposes on this path.
    T2 = 160
    x2 = jax.random.normal(kx2, (S, J, T2), dtype=jnp.float32)
    ref_out2, _ = _reference(x2, kappa, dist, k=1.0)
    out2, _ = spatial_agg(x2, kappa, dist, k=1.0)
    jax.block_until_ready(out2)
    assert out2.shape == (S, R, D, T2)
    assert jnp.allclose(out2, ref_out2, atol=1e-5, rtol=1e-5)

    print("KERNEL_OK")
</pallas_src>

<mosaic_0001>
module attributes {stable_mosaic.version = 11 : i64} {
  func.func @_otu_weights_kernel(%arg0: i32, %arg1: memref<1x8x1xf32, #tpu.memory_space<vmem>>, %arg2: memref<8x16xf32, #tpu.memory_space<vmem>>, %arg3: memref<1x8x16xf32, #tpu.memory_space<vmem>>) attributes {dimension_semantics = [#tpu.dimension_semantics<parallel>], iteration_bounds = array<i64: 4>, scalar_prefetch = 0 : i64, scratch_operands = 0 : i64, tpu.core_type = #tpu.core_type<tc>, window_params = [{transform_indices = @transform_0, window_bounds = array<i64: 1, 8, 1>}, {pipeline_mode = #tpu.pipeline_mode<synchronous>, transform_indices = @transform_1, window_bounds = array<i64: 8, 16>}, {transform_indices = @transform_2, window_bounds = array<i64: 1, 8, 16>}]} {
    %c0 = arith.constant 0 : index
    %c0_0 = arith.constant 0 : index
    %c0_1 = arith.constant 0 : index
    %0 = vector.load %arg1[%c0, %c0_0, %c0_1] : memref<1x8x1xf32, #tpu.memory_space<vmem>>, vector<1x8x1xf32>
    %1 = vector.shape_cast %0 : vector<1x8x1xf32> to vector<8x1xf32>
    %2 = arith.mulf %1, %1 : vector<8x1xf32>
    %c0_2 = arith.constant 0 : index
    %c0_3 = arith.constant 0 : index
    %3 = vector.load %arg2[%c0_2, %c0_3] : memref<8x16xf32, #tpu.memory_space<vmem>>, vector<8x16xf32>
    %4 = vector.broadcast %2 : vector<8x1xf32> to vector<8x16xf32>
    %5 = arith.subf %4, %3 : vector<8x16xf32>
    %cst = arith.constant 2.000000e+00 : f32
    %6 = vector.broadcast %cst : f32 to vector<8x16xf32>
    %7 = arith.mulf %6, %5 : vector<8x16xf32>
    %8 = arith.negf %7 : vector<8x16xf32>
    %9 = math.exp %8 : vector<8x16xf32>
    %cst_4 = arith.constant 1.000000e+00 : f32
    %10 = vector.broadcast %cst_4 : f32 to vector<8x16xf32>
    %11 = arith.addf %10, %9 : vector<8x16xf32>
    %12 = arith.divf %10, %11 : vector<8x16xf32>
    %cst_5 = arith.constant dense<0.000000e+00> : vector<8xf32>
    %13 = vector.multi_reduction <add>, %12, %cst_5 [1] : vector<8x16xf32> to vector<8xf32>
    %14 = vector.shape_cast %13 : vector<8xf32> to vector<8x1xf32>
    %cst_6 = arith.constant 1.000000e+00 : f32
    %15 = vector.broadcast %cst_6 : f32 to vector<8x1xf32>
    %16 = arith.maximumf %14, %15 : vector<8x1xf32>
    %17 = vector.broadcast %16 : vector<8x1xf32> to vector<8x16xf32>
    %18 = arith.divf %12, %17 : vector<8x16xf32>
    %c0_7 = arith.constant 0 : index
    %c0_8 = arith.constant 0 : index
    %c0_9 = arith.constant 0 : index
    %19 = vector.load %arg3[%c0_7, %c0_8, %c0_9] : memref<1x8x16xf32, #tpu.memory_space<vmem>>, vector<1x8x16xf32>
    %20 = vector.shape_cast %19 : vector<1x8x16xf32> to vector<8x16xf32>
    %21 = vector.shape_cast %18 : vector<8x16xf32> to vector<1x8x16xf32>
    tpu.vector_store %arg3[%c0_7, %c0_8, %c0_9], %21 {strides = array<i32>} : memref<1x8x16xf32, #tpu.memory_space<vmem>>, vector<1x8x16xf32>,
    return
  }
  func.func @transform_0(%arg0: i32) -> (i32, i32, i32) {
    %c0_i32 = arith.constant 0 : i32
    %c0_i32_0 = arith.constant 0 : i32
    %c0_i32_1 = arith.constant 0 : i32
    return %arg0, %c0_i32, %c0_i32_0 : i32, i32, i32
  }
  func.func @transform_1(%arg0: i32) -> (i32, i32) {
    %c0_i32 = arith.constant 0 : i32
    %c0_i32_0 = arith.constant 0 : i32
    %c0_i32_1 = arith.constant 0 : i32
    return %c0_i32, %c0_i32_0 : i32, i32
  }
  func.func @transform_2(%arg0: i32) -> (i32, i32, i32) {
    %c0_i32 = arith.constant 0 : i32
    %c0_i32_0 = arith.constant 0 : i32
    %c0_i32_1 = arith.constant 0 : i32
    return %arg0, %c0_i32, %c0_i32_0 : i32, i32, i32
  }
}

</mosaic_0001>

<llo_original>
// kernel: tpu_custom_call.1
$region0: #{tpu_custom_call.1}
  #allocation0 [shape = 'u32[]', space=smem, size = 0x4, offset = 0x4, fixed_abs, tag = 'smem constant byte address 0x4 - core index']
  #allocation1 [shape = 'u32[144,128]{1,0:T(1,128)}', space=vmem, size = 0x12000, scoped, tag = 'internal scratch']
  %s0 = inlined_call_operand.vmem [shape: f32[4,8,1], index: 0, kind: input, shape index: {}]
  %s1 = inlined_call_operand.vmem [shape: f32[8,16], index: 1, kind: input, shape index: {}]
  %s2 = inlined_call_operand.hbm [shape: f32[4,8,16], index: 2, kind: output, shape index: {}]
  %s3 = sld [smem:[#allocation0]]
  $region41: #{tpu_custom_call.1} parent=0
    _
  %s5 = ssub.s32 1, %s3
  %s6 = scalar_select 0, %s5, %s3
  $region1: #{tpu_custom_call.1} parent=0
    #allocation2 [shape = 'u8[8192]{0}', space=vmem, size = 0x2000, scoped, tag = 'output window, operand 0']
    #allocation3 [shape = 's32[2]{0}', space=sflag, size = 0x8, scoped, tag = 'scoped memory for tpu_custom_call.1']
    %7 = vsyncpa [#allocation3], 0
    %s8 = scalar_lea.sflag [#allocation3], 1
    %9 = vsyncpa %s8, 0
    loop: start=0, step=1, limit=6
    $region2: #{tpu_custom_call.1} parent=1 // loop_pre_header
      _
    $region3: #{tpu_custom_call.1} parent=1 // loop_header
      %s11 = sphi 0, %s15
      %p12 = scmp.ge.s32.totalorder %s11, 6
      %s21 = sphi 0, %s23
      %s24 = sphi 0, %s21
      %s25 = sphi 0, %s24
      %s41 = sphi 0, %s25
      %s45 = sphi 0, %s45
      %s47 = sphi 0, %s45
      %s48 = sphi 0, %s47
      %s62 = sphi 0, %s48
      %s68 = sphi 0, %s70
      %s71 = sphi 0, %s68
      %s72 = sphi 0, %s71
      %s88 = sphi 0, %s72
    $region4: #{tpu_custom_call.1} parent=1 // loop_header_branch
      %14 = sbr.rel (%p12) target = $region8
    $region5: #{tpu_custom_call.1} parent=1 // loop_body
      %s16 = ssub.s32 %s11, 1
      %s17 = ssub.s32 %s11, 2
      %s18 = sadd.s32 %s11, 1
      %s19 = ssub.s32 %s11, %s18
      %p20 = scmp.eq.s32.totalorder %s19, 0
      %s22 = sadd.s32 %s21, 1
      %s23 = scalar_select %p20, %s21, %s22
      %p26 = pneg %p20
      %p27 = scmp.eq.s32.totalorder %s11, 3
      %p28 = por %p26, %p27
      %p29 = scmp.ne.s32.totalorder %s21, %s24
      %p30 = scmp.eq.s32.totalorder %s11, 0
      %p31 = por %p29, %p30
      %p32 = scmp.ne.s32.totalorder %s21, %s24
      %p33 = scmp.eq.s32.totalorder %s16, 3
      %p34 = por %p32, %p33
      %p35 = scmp.ne.s32.totalorder %s24, %s25
      %p36 = scmp.eq.s32.totalorder %s16, 0
      %p37 = por %p35, %p36
      %p38 = scmp.ne.s32.totalorder %s24, %s25
      %p39 = scmp.eq.s32.totalorder %s17, 3
      %p40 = por %p38, %p39
      %p42 = scmp.ne.s32.totalorder %s25, %s41
      %p43 = scmp.eq.s32.totalorder %s17, 0
      %p44 = por %p42, %p43
      %s46 = sadd.s32 %s45, 1
      %p49 = scmp.eq.s32.totalorder %s11, 3
      %p50 = scmp.ne.s32.totalorder %s45, %s47
      %p51 = scmp.eq.s32.totalorder %s11, 0
      %p52 = por %p50, %p51
      %p53 = scmp.ne.s32.totalorder %s45, %s47
      %p54 = scmp.eq.s32.totalorder %s16, 3
      %p55 = por %p53, %p54
      %p56 = scmp.ne.s32.totalorder %s47, %s48
      %p57 = scmp.eq.s32.totalorder %s16, 0
      %p58 = por %p56, %p57
      %p59 = scmp.ne.s32.totalorder %s47, %s48
      %p60 = scmp.eq.s32.totalorder %s17, 3
      %p61 = por %p59, %p60
      %p63 = scmp.ne.s32.totalorder %s48, %s62
      %p64 = scmp.eq.s32.totalorder %s17, 0
      %p65 = por %p63, %p64
      %s66 = ssub.s32 %s11, %s18
      %p67 = scmp.eq.s32.totalorder %s66, 0
      %s69 = sadd.s32 %s68, 1
      %s70 = scalar_select %p67, %s68, %s69
      %p73 = pneg %p67
      %p74 = scmp.eq.s32.totalorder %s11, 3
      %p75 = por %p73, %p74
      %p76 = scmp.ne.s32.totalorder %s68, %s71
      %p77 = scmp.eq.s32.totalorder %s11, 0
      %p78 = por %p76, %p77
      %p79 = scmp.ne.s32.totalorder %s68, %s71
      %p80 = scmp.eq.s32.totalorder %s16, 3
      %p81 = por %p79, %p80
      %p82 = scmp.ne.s32.totalorder %s71, %s72
      %p83 = scmp.eq.s32.totalorder %s16, 0
      %p84 = por %p82, %p83
      %p85 = scmp.ne.s32.totalorder %s71, %s72
      %p86 = scmp.eq.s32.totalorder %s17, 3
      %p87 = por %p85, %p86
      %p89 = scmp.ne.s32.totalorder %s72, %s88
      %p90 = scmp.eq.s32.totalorder %s17, 0
      %p91 = por %p89, %p90
      %p92 = scmp.le.s32.totalorder 1, %s11
      %p93 = scmp.lt.s32.totalorder %s11, 5
      %p94 = pnand %p92, %p93
      %p95 = pneg %p94
      // Predicated region
      $region9: #{tpu_custom_call.1} parent=5 // pred_check
        _
      $region10: #{tpu_custom_call.1} parent=5 // pred_check_branch
        %97 = sbr.rel (%p94) target = $region12
      $region11: #{tpu_custom_call.1} parent=5 // pred_region
        %s98 = ssub.s32 %s11, 1
        // Predicated region
        $region13: #{tpu_custom_call.1} parent=11 // pred_check
          %p99 = pneg %p58
        $region14: #{tpu_custom_call.1} parent=11 // pred_check_branch
          %101 = sbr.rel (%p99) target = $region16
        $region15: #{tpu_custom_call.1} parent=11 // pred_region
          _
        $region16: #{tpu_custom_call.1} parent=11 // pred_fallthru
          _
      $region12: #{tpu_custom_call.1} parent=5 // pred_fallthru
        _
      %p102 = scmp.lt.s32.totalorder %s11, 4
      // Predicated region
      $region17: #{tpu_custom_call.1} parent=5 // pred_check
        %p103 = pneg %p102
      $region18: #{tpu_custom_call.1} parent=5 // pred_check_branch
        %105 = sbr.rel (%p103) target = $region20
      $region19: #{tpu_custom_call.1} parent=5 // pred_region
        // Predicated region
        $region21: #{tpu_custom_call.1} parent=19 // pred_check
          %p106 = pneg %p31
        $region22: #{tpu_custom_call.1} parent=19 // pred_check_branch
          %108 = sbr.rel (%p106) target = $region24
        $region23: #{tpu_custom_call.1} parent=19 // pred_region
          %p109 = scmp.lt.s32.totalorder %s11, 3
          %s110 = scalar_select %p109, %s11, 3
          %s111 = smul.addr %s110, 8
          %s112 = scalar_lea.vmem %s0, %s111
        $region24: #{tpu_custom_call.1} parent=19 // pred_fallthru
          _
      $region20: #{tpu_custom_call.1} parent=5 // pred_fallthru
        _
      %p113 = scmp.le.s32.totalorder 1, %s11
      %p114 = scmp.lt.s32.totalorder %s11, 5
      %p115 = pnand %p113, %p114
      %p116 = pneg %p115
      // Predicated region
      $region25: #{tpu_custom_call.1} parent=5 // pred_check
        _
      $region26: #{tpu_custom_call.1} parent=5 // pred_check_branch
        %118 = sbr.rel (%p115) target = $region28
      $region27: #{tpu_custom_call.1} parent=5 // pred_region
        %s119 = ssub.s32 %s11, 1
        %p120 = scmp.lt.s32.totalorder %s16, 3
        %s121 = scalar_select %p120, %s16, 3
        %s122 = smul.addr %s121, 8
        %s123 = scalar_lea.vmem %s0, %s122
        %p124 = pneg %p37
        %p125 = pneg %p34
        %p126 = pneg %p58
        %p127 = pneg %p55
        %p128 = pneg %p84
        %p129 = pneg %p81
        %s130 = sand.u32 %s71, 1
        %s131 = scalar_lea.sflag [#allocation3], %s130
        %s132 = sand.u32 %s71, 1
        %s133 = smul.addr %s132, 8
        %s134 = scalar_lea.vmem [#allocation2], %s133
        %p135 = scmp.lt.s32.totalorder %s16, 3
        %s136 = scalar_select %p135, %s16, 3
        %s137 = smul.addr %s136, 8
        %s138 = scalar_lea.vmem %s0, %s137
        %v139 = vld [vmem:[%s138] sm:$0xff]
        %v140 = vmul.f32 %v139, %v139
        %v141 = vld [vmem:[%s1] sm:$0xff]
        %143 = vset.pattern.permute.xlu0 0
        %144 = vperm.xlu0 %143, %v140
        %v145 = vpop.permute.xlu0 %144
        %v147 = vsub.f32 %v145, %v141
        %v148 = vmul.f32 %v147, 2.0
        %v149 = vxor.u32 %v148, 2147483648
        %v150 = vmul.f32 %v149, 1.442695
        %v151 = vpow.pop %v150
        %v152 = vadd.f32 %v151, 1.0
        %v153 = vrcp.pop %v152
        %v154 = vmul.f32 1.0, %v153
        %vm155 = vcmask 130048
        %v156 = vsel %vm155, %v154, 0.0
        %157 = vadd.xlane.f32.xlu0 %v156
        %v158 = vpop.xlane.xlu0 %157
        %v159 = vmax.f32 %v158, 1.0
        %v160 = vrcp.pop %v159
        %v161 = vmul.f32 %v154, %v160
        %162 = vst.msk [vmem:[%s134] sm:$0xff] %vm155, %v161
        %s163 = sand.u32 %s71, 1
        %s164 = scalar_lea.sflag [#allocation3], %s163
        %s165 = sand.u32 %s71, 1
        %s166 = smul.addr %s165, 8
        %s167 = scalar_lea.vmem [#allocation2], %s166
        // Predicated region
        $region29: #{tpu_custom_call.1} parent=27 // pred_check
          %p168 = pneg %p81
        $region30: #{tpu_custom_call.1} parent=27 // pred_check_branch
          %170 = sbr.rel (%p168) target = $region32
        $region31: #{tpu_custom_call.1} parent=27 // pred_region
          %s172 = ssub.s32 128, 128
          %173 = vsyncadd %s164, %s172
          %s174 = smul.addr %s16, 128
          %s175 = scalar_lea.hbm %s2, %s174
          %s177 = sshll.u32 %s167, 4
          %s178 = int_to_ptr.vmem [resolvable:$true] %s177
          %180 = dma.vmem_to_hbm [thread:$0]  %s178, 128, %s175, %s164
        $region32: #{tpu_custom_call.1} parent=27 // pred_fallthru
          _
      $region28: #{tpu_custom_call.1} parent=5 // pred_fallthru
        _
      %p181 = scmp.le.s32.totalorder 2, %s11
      // Predicated region
      $region33: #{tpu_custom_call.1} parent=5 // pred_check
        %p182 = pneg %p181
      $region34: #{tpu_custom_call.1} parent=5 // pred_check_branch
        %184 = sbr.rel (%p182) target = $region36
      $region35: #{tpu_custom_call.1} parent=5 // pred_region
        %s185 = ssub.s32 %s11, 2
        // Predicated region
        $region37: #{tpu_custom_call.1} parent=35 // pred_check
          %p186 = pneg %p87
        $region38: #{tpu_custom_call.1} parent=35 // pred_check_branch
          %188 = sbr.rel (%p186) target = $region40
        $region39: #{tpu_custom_call.1} parent=35 // pred_region
          %s189 = sand.u32 %s72, 1
          %s190 = scalar_lea.sflag [#allocation3], %s189
          %s191 = sand.u32 %s72, 1
          %s192 = smul.addr %s191, 8
          %s193 = scalar_lea.vmem [#allocation2], %s192
          %194 = dma.done %s190, 128
        $region40: #{tpu_custom_call.1} parent=35 // pred_fallthru
          _
      $region36: #{tpu_custom_call.1} parent=5 // pred_fallthru
        _
    $region6: #{tpu_custom_call.1} parent=1 // loop_footer
      %s15 = sadd.s32 1, %s11
    $region7: #{tpu_custom_call.1} parent=1 // loop_footer_branch
      %10 = sbr.rel target = $region3
    $region8: #{tpu_custom_call.1} parent=1 // loop_exit
      _
    %195 = vsyncpa [#allocation3], 1
    %s196 = scalar_lea.sflag [#allocation3], 1
    %197 = vsyncpa %s196, 1

</llo_original>
